<compile_context>
chip_gen: v7x
topology: tpu7x:2x2x1
jax: 0.10.0
libtpu: 0.0.40
codegen_flags: <defaults>
</compile_context>

<pallas_src>
import functools

import jax
import jax.numpy as jnp
from jax import lax
from jax.experimental import pallas as pl
from jax.experimental.pallas import tpu as pltpu

VMEM_LIMIT = 32 * 1024 * 1024   # scoped default; keeps headroom on v7x (64 MiB)
PAD_MULT = 256                  # node-set padding so 128..512 tiles divide evenly


# ---------------------------------------------------------------- Pallas kernels

def encode_project_kernel(emb_ref, x_ref, wlin_ref, b_ref, wmsg_ref,
                          xo_ref, msg_ref):
    # Fused encode + layer-1 message projection (one dst-row tile):
    #   x   = emb + x_in @ W_lin + b          (f32)
    #   msg = (x @ W_msg).astype(bf16)        (bf16 for the aggregation MXU)
    x = (emb_ref[...]
         + jnp.dot(x_ref[...], wlin_ref[...], preferred_element_type=jnp.float32)
         + b_ref[...])
    xo_ref[...] = x
    msg_ref[...] = jnp.dot(x, wmsg_ref[...],
                           preferred_element_type=jnp.float32
                           ).astype(jnp.bfloat16)


def sage_agg_kernel(*refs, apply_relu, emit_next_msg):
    # grid = (dst_tiles [parallel], src_tiles [arbitrary]).
    # The output block is invariant across k -> stays resident in VMEM and is
    # used directly as the accumulator (no scratch).
    if emit_next_msg:
        (adj_ref, msg_ref, xdst_ref, wroot_ref, b_ref, wnext_ref,
         o_ref, nmsg_ref) = refs
    else:
        adj_ref, msg_ref, xdst_ref, wroot_ref, b_ref, o_ref = refs
        wnext_ref = nmsg_ref = None

    k = pl.program_id(1)

    @pl.when(k == 0)
    def _():
        # Initialise with the root term + bias (overlaps with the first
        # adjacency DMA instead of sitting on the serialized tail).
        o_ref[...] = (jnp.dot(xdst_ref[...], wroot_ref[...],
                              preferred_element_type=jnp.float32)
                      + b_ref[...])

    # bf16 adj x bf16 msg -> f32 accumulation: full-rate MXU path.
    o_ref[...] += jnp.dot(adj_ref[...], msg_ref[...],
                          preferred_element_type=jnp.float32)

    if apply_relu or emit_next_msg:
        @pl.when(k == pl.num_programs(1) - 1)
        def _():
            out = o_ref[...]
            if apply_relu:
                out = jnp.maximum(out, 0.0)
                o_ref[...] = out
            if emit_next_msg:
                # Fused next-layer message projection (saves a pallas_call
                # and an HBM round-trip of the layer-1 activations).
                nmsg_ref[...] = jnp.dot(out, wnext_ref[...],
                                        preferred_element_type=jnp.float32
                                        ).astype(jnp.bfloat16)


def dot_kernel(u_ref, a_ref, o_ref):
    # Classifier: per-edge dot product, emitted lane-dense as a (1, E_pad)
    # block (edges on the lane axis) in a single grid step.
    p = u_ref[...] * a_ref[...]                         # (E_pad, H) f32
    ones = jnp.ones((1, p.shape[1]), jnp.float32)
    o_ref[...] = lax.dot_general(ones, p, (((1,), (1,)), ((), ())),
                                 preferred_element_type=jnp.float32)


# ---------------------------------------------------------------- wrappers

def _choose_tile(n_pad, target=512, prefer_multi=False):
    # Largest multiple-of-128 tile <= target dividing n_pad.  With
    # prefer_multi, prefer a tile leaving >= 2 tiles so the "parallel" dst
    # axis can shard across both v7x TensorCores.
    divs = [t for t in range(128, min(target, n_pad) + 1, 128) if n_pad % t == 0]
    if prefer_multi:
        multi = [t for t in divs if n_pad // t >= 2]
        if multi:
            return max(multi)
    return max(divs)


def encode_project(emb_rows, x, w_lin, b, w_msg, *, tm):
    n, h = emb_rows.shape
    f = x.shape[1]
    return pl.pallas_call(
        encode_project_kernel,
        grid=(n // tm,),
        in_specs=[pl.BlockSpec((tm, h), lambda i: (i, 0)),
                  pl.BlockSpec((tm, f), lambda i: (i, 0)),
                  pl.BlockSpec((f, h), lambda i: (0, 0)),
                  pl.BlockSpec((1, h), lambda i: (0, 0)),
                  pl.BlockSpec((h, h), lambda i: (0, 0))],
        out_specs=[pl.BlockSpec((tm, h), lambda i: (i, 0)),
                   pl.BlockSpec((tm, h), lambda i: (i, 0))],
        out_shape=[jax.ShapeDtypeStruct((n, h), jnp.float32),
                   jax.ShapeDtypeStruct((n, h), jnp.bfloat16)],
        compiler_params=pltpu.CompilerParams(
            dimension_semantics=("parallel",),
            vmem_limit_bytes=VMEM_LIMIT),
    )(emb_rows, x, w_lin, b, w_msg)


def sage_dst_update(adj, msg, x_dst, w_root, b, w_msg_next=None, *,
                    apply_relu, tm, tk):
    # adj is the (n_dst, n_src) bf16 adjacency for this edge direction.
    n_dst, n_src = adj.shape
    h = msg.shape[1]
    emit_next = w_msg_next is not None
    kernel = functools.partial(sage_agg_kernel, apply_relu=apply_relu,
                               emit_next_msg=emit_next)

    in_specs = [pl.BlockSpec((tm, tk), lambda i, k: (i, k)),
                pl.BlockSpec((tk, h), lambda i, k: (k, 0)),
                pl.BlockSpec((tm, h), lambda i, k: (i, 0)),
                pl.BlockSpec((h, h), lambda i, k: (0, 0)),
                pl.BlockSpec((1, h), lambda i, k: (0, 0))]
    args = [adj, msg, x_dst, w_root, b]
    out_specs = [pl.BlockSpec((tm, h), lambda i, k: (i, 0))]
    out_shape = [jax.ShapeDtypeStruct((n_dst, h), jnp.float32)]
    if emit_next:
        in_specs.append(pl.BlockSpec((h, h), lambda i, k: (0, 0)))
        args.append(w_msg_next)
        out_specs.append(pl.BlockSpec((tm, h), lambda i, k: (i, 0)))
        out_shape.append(jax.ShapeDtypeStruct((n_dst, h), jnp.bfloat16))

    out = pl.pallas_call(
        kernel,
        grid=(n_dst // tm, n_src // tk),
        in_specs=in_specs,
        out_specs=out_specs,
        out_shape=out_shape,
        compiler_params=pltpu.CompilerParams(
            dimension_semantics=("parallel", "arbitrary"),
            vmem_limit_bytes=VMEM_LIMIT),
    )(*args)
    if emit_next:
        return out[0], out[1]
    return out[0]


def edge_dot(x_u, x_a, n_valid):
    # Whole padded label-edge set in one grid step; lane-dense output.
    # TODO(synk): for very large label-edge sets, tile the edge axis instead.
    e_pad, h = x_u.shape
    out = pl.pallas_call(
        dot_kernel,
        grid=(1,),
        in_specs=[pl.BlockSpec((e_pad, h), lambda i: (0, 0)),
                  pl.BlockSpec((e_pad, h), lambda i: (0, 0))],
        out_specs=pl.BlockSpec((1, e_pad), lambda i: (0, 0)),
        out_shape=jax.ShapeDtypeStruct((1, e_pad), jnp.float32),
        compiler_params=pltpu.CompilerParams(
            dimension_semantics=("arbitrary",),
            vmem_limit_bytes=VMEM_LIMIT),
    )(x_u, x_a)
    return out[0, :n_valid]


# ---------------------------------------------------------------- full forward

def _pad_rows(a, m):
    n = a.shape[0]
    p = (-n) % m
    if p == 0:
        return a
    return jnp.pad(a, [(0, p)] + [(0, 0)] * (a.ndim - 1))


def gnn_forward(params, batch):
    # --- pad node sets so tiles divide evenly (zero-padded rows are inert:
    #     their adjacency rows/columns are all zero, and the classifier never
    #     selects them) ---
    user_x = _pad_rows(batch["user_x"], PAD_MULT)
    app_x = _pad_rows(batch["app_x"], PAD_MULT)
    user_nid = _pad_rows(batch["user_n_id"], PAD_MULT)
    app_nid = _pad_rows(batch["app_n_id"], PAD_MULT)
    n_user_p, n_app_p = user_x.shape[0], app_x.shape[0]

    tm_user = _choose_tile(n_user_p, prefer_multi=True)   # dst-axis tiles
    tm_app = _choose_tile(n_app_p, prefer_multi=True)
    tk_user = _choose_tile(n_user_p)                       # src (contraction) tiles
    tk_app = _choose_tile(n_app_p)

    # --- fused encode + layer-1 message projection (1 call per node type) ---
    # TODO(synk): embedding-table row gather stays in plain JAX (jnp.take);
    # the add + matmuls run in the fused Pallas kernel.
    p1, p2 = params["l1"], params["l2"]
    user_emb_rows = jnp.take(params["user_emb"], user_nid, axis=0)
    app_emb_rows = jnp.take(params["app_emb"], app_nid, axis=0)
    x_user, msg_u = encode_project(user_emb_rows, user_x,
                                   params["user_lin_w"], params["user_lin_b"],
                                   p1["u2a_w_msg"], tm=tm_user)
    x_app, msg_a = encode_project(app_emb_rows, app_x,
                                  params["app_lin_w"], params["app_lin_b"],
                                  p1["a2u_w_msg"], tm=tm_app)

    # --- dense adjacency, bf16 (exact for parallel-edge multiplicities <= 256).
    # Both directions are materialised once so no kernel ever transposes a
    # block (no per-block XLU transpose).
    # TODO(synk): for production-scale sparse graphs replace the dense
    # adjacency matmul with a scalar-prefetch segment-sum gather aggregation;
    # on v7x the adjacency could additionally be stored as fp8 (e4m3).
    src_u, dst_a = batch["edge_index_u2a"]            # user -> app
    adj = (jnp.zeros((n_app_p, n_user_p), jnp.float32)
           .at[dst_a, src_u].add(1.0)).astype(jnp.bfloat16)
    adj_t = (jnp.zeros((n_user_p, n_app_p), jnp.float32)
             .at[src_u, dst_a].add(1.0)).astype(jnp.bfloat16)

    # --- layer 1 (ReLU); epilogue also emits the layer-2 bf16 messages ---
    x_app1, msg_a2 = sage_dst_update(adj, msg_u, x_app, p1["u2a_w_root"],
                                     p1["u2a_b"], p2["a2u_w_msg"],
                                     apply_relu=True, tm=tm_app, tk=tk_user)
    x_user1, msg_u2 = sage_dst_update(adj_t, msg_a, x_user, p1["a2u_w_root"],
                                      p1["a2u_b"], p2["u2a_w_msg"],
                                      apply_relu=True, tm=tm_user, tk=tk_app)

    # --- layer 2 (no ReLU) ---
    x_app2 = sage_dst_update(adj, msg_u2, x_app1, p2["u2a_w_root"],
                             p2["u2a_b"], apply_relu=False,
                             tm=tm_app, tk=tk_user)
    x_user2 = sage_dst_update(adj_t, msg_a2, x_user1, p2["a2u_w_root"],
                              p2["a2u_b"], apply_relu=False,
                              tm=tm_user, tk=tk_app)

    # --- classifier: (x_user[eli[0]] * x_app[eli[1]]).sum(-1) ---
    # TODO(synk): the per-edge row gather stays in plain JAX (jnp.take).
    eli = batch["edge_label_index"]
    u_sel = _pad_rows(jnp.take(x_user2, eli[0], axis=0), 128)
    a_sel = _pad_rows(jnp.take(x_app2, eli[1], axis=0), 128)
    return edge_dot(u_sel, a_sel, eli.shape[1])


# ---------------------------------------------------------------- reference
# Pure-JAX reference with the SAME precision policy as the kernels
# (bf16 adjacency + bf16 messages, f32 accumulation, f32 root/encode/classifier).

def gnn_forward_ref(params, batch):
    x_user = (jnp.take(params["user_emb"], batch["user_n_id"], axis=0)
              + batch["user_x"] @ params["user_lin_w"] + params["user_lin_b"][0])
    x_app = (jnp.take(params["app_emb"], batch["app_n_id"], axis=0)
             + batch["app_x"] @ params["app_lin_w"] + params["app_lin_b"][0])
    n_user, n_app = x_user.shape[0], x_app.shape[0]
    src_u, dst_a = batch["edge_index_u2a"]
    adj = (jnp.zeros((n_app, n_user), jnp.float32)
           .at[dst_a, src_u].add(1.0)).astype(jnp.bfloat16)
    adj_t = (jnp.zeros((n_user, n_app), jnp.float32)
             .at[src_u, dst_a].add(1.0)).astype(jnp.bfloat16)
    for layer, relu in (("l1", True), ("l2", False)):
        p = params[layer]
        msg_u = (x_user @ p["u2a_w_msg"]).astype(jnp.bfloat16)
        msg_a = (x_app @ p["a2u_w_msg"]).astype(jnp.bfloat16)
        new_app = (jnp.dot(adj, msg_u, preferred_element_type=jnp.float32)
                   + x_app @ p["u2a_w_root"] + p["u2a_b"][0])
        new_user = (jnp.dot(adj_t, msg_a, preferred_element_type=jnp.float32)
                    + x_user @ p["a2u_w_root"] + p["a2u_b"][0])
        if relu:
            new_app = jnp.maximum(new_app, 0.0)
            new_user = jnp.maximum(new_user, 0.0)
        x_user, x_app = new_user, new_app
    eli = batch["edge_label_index"]
    return (x_user[eli[0]] * x_app[eli[1]]).sum(-1)


# ---------------------------------------------------------------- setup

def make_params(key, *, n_user_total, n_app_total, f_user, f_app, hidden):
    ks = jax.random.split(key, 18)

    def init(k, shape, scale=0.1):
        return (scale * jax.random.normal(k, shape)).astype(jnp.float32)

    params = {
        "user_emb": init(ks[0], (n_user_total, hidden)),
        "app_emb": init(ks[1], (n_app_total, hidden)),
        "user_lin_w": init(ks[2], (f_user, hidden)),
        "user_lin_b": init(ks[3], (1, hidden)),
        "app_lin_w": init(ks[4], (f_app, hidden)),
        "app_lin_b": init(ks[5], (1, hidden)),
    }
    for i, layer in enumerate(("l1", "l2")):
        base = 6 + 6 * i
        params[layer] = {
            "u2a_w_msg": init(ks[base + 0], (hidden, hidden)),
            "u2a_w_root": init(ks[base + 1], (hidden, hidden)),
            "u2a_b": init(ks[base + 2], (1, hidden)),
            "a2u_w_msg": init(ks[base + 3], (hidden, hidden)),
            "a2u_w_root": init(ks[base + 4], (hidden, hidden)),
            "a2u_b": init(ks[base + 5], (1, hidden)),
        }
    return params


def make_batch(key, *, n_user, n_app, n_user_total, n_app_total,
               f_user, f_app, n_edges, n_label_edges):
    ks = jax.random.split(key, 8)
    return {
        "user_n_id": jax.random.randint(ks[0], (n_user,), 0, n_user_total),
        "app_n_id": jax.random.randint(ks[1], (n_app,), 0, n_app_total),
        "user_x": jax.random.normal(ks[2], (n_user, f_user), jnp.float32),
        "app_x": jax.random.normal(ks[3], (n_app, f_app), jnp.float32),
        "edge_index_u2a": jnp.stack([
            jax.random.randint(ks[4], (n_edges,), 0, n_user),
            jax.random.randint(ks[5], (n_edges,), 0, n_app),
        ]),
        "edge_label_index": jnp.stack([
            jax.random.randint(ks[6], (n_label_edges,), 0, n_user),
            jax.random.randint(ks[7], (n_label_edges,), 0, n_app),
        ]),
    }


if __name__ == "__main__":
    key = jax.random.PRNGKey(0)
    k_params, k_batch = jax.random.split(key)

    HIDDEN = 128                      # lane-dense hidden dimension
    N_USER, N_APP = 300, 200          # padded to 512 / 256 -> multi-tile grids
    F_USER, F_APP = 8, 16
    N_EDGES, N_LABEL = 2048, 300

    params = make_params(k_params, n_user_total=1000, n_app_total=500,
                         f_user=F_USER, f_app=F_APP, hidden=HIDDEN)
    batch = make_batch(k_batch, n_user=N_USER, n_app=N_APP,
                       n_user_total=1000, n_app_total=500,
                       f_user=F_USER, f_app=F_APP,
                       n_edges=N_EDGES, n_label_edges=N_LABEL)

    pred = jax.block_until_ready(gnn_forward(params, batch))
    ref = jax.block_until_ready(gnn_forward_ref(params, batch))

    assert pred.shape == (N_LABEL,), pred.shape
    # Tolerance accounts for bf16-rounding boundary flips between the tiled
    # kernel accumulation and the unblocked reference.
    assert jnp.allclose(pred, ref, atol=5e-2, rtol=1e-2), (
        float(jnp.max(jnp.abs(pred - ref))))
    print("KERNEL_OK")
</pallas_src>

<mosaic_0001>
module attributes {stable_mosaic.version = 11 : i64} {
  func.func @encode_project_kernel(%arg0: i32, %arg1: memref<256x128xf32, #tpu.memory_space<vmem>>, %arg2: memref<256x8xf32, #tpu.memory_space<vmem>>, %arg3: memref<8x128xf32, #tpu.memory_space<vmem>>, %arg4: memref<1x128xf32, #tpu.memory_space<vmem>>, %arg5: memref<128x128xf32, #tpu.memory_space<vmem>>, %arg6: memref<256x128xf32, #tpu.memory_space<vmem>>, %arg7: memref<256x128xbf16, #tpu.memory_space<vmem>>) attributes {dimension_semantics = [#tpu.dimension_semantics<parallel>], iteration_bounds = array<i64: 2>, scalar_prefetch = 0 : i64, scratch_operands = 0 : i64, tpu.core_type = #tpu.core_type<tc>, window_params = [{transform_indices = @transform_0, window_bounds = array<i64: 256, 128>}, {transform_indices = @transform_1, window_bounds = array<i64: 256, 8>}, {pipeline_mode = #tpu.pipeline_mode<synchronous>, transform_indices = @transform_2, window_bounds = array<i64: 8, 128>}, {pipeline_mode = #tpu.pipeline_mode<synchronous>, transform_indices = @transform_3, window_bounds = array<i64: 1, 128>}, {pipeline_mode = #tpu.pipeline_mode<synchronous>, transform_indices = @transform_4, window_bounds = array<i64: 128, 128>}, {transform_indices = @transform_5, window_bounds = array<i64: 256, 128>}, {transform_indices = @transform_6, window_bounds = array<i64: 256, 128>}]} {
    %c0 = arith.constant 0 : index
    %c0_0 = arith.constant 0 : index
    %0 = vector.load %arg1[%c0, %c0_0] : memref<256x128xf32, #tpu.memory_space<vmem>>, vector<256x128xf32>
    %c0_1 = arith.constant 0 : index
    %c0_2 = arith.constant 0 : index
    %1 = vector.load %arg2[%c0_1, %c0_2] : memref<256x8xf32, #tpu.memory_space<vmem>>, vector<256x8xf32>
    %c0_3 = arith.constant 0 : index
    %c0_4 = arith.constant 0 : index
    %2 = vector.load %arg3[%c0_3, %c0_4] : memref<8x128xf32, #tpu.memory_space<vmem>>, vector<8x128xf32>
    %cst = arith.constant dense<0.000000e+00> : vector<256x128xf32>
    %3 = tpu.matmul %1, %2, %cst {dimension_numbers = #tpu.dot_dimension_numbers<[1], [0], [0], [1], [0, 0, 1, 1], [], []>} : vector<256x8xf32>, vector<8x128xf32>, vector<256x128xf32> -> vector<256x128xf32>
    %4 = arith.addf %0, %3 : vector<256x128xf32>
    %c0_5 = arith.constant 0 : index
    %c0_6 = arith.constant 0 : index
    %5 = vector.load %arg4[%c0_5, %c0_6] : memref<1x128xf32, #tpu.memory_space<vmem>>, vector<1x128xf32>
    %6 = vector.broadcast %5 : vector<1x128xf32> to vector<256x128xf32>
    %7 = arith.addf %4, %6 : vector<256x128xf32>
    %c0_7 = arith.constant 0 : index
    %c0_8 = arith.constant 0 : index
    %8 = vector.load %arg6[%c0_7, %c0_8] : memref<256x128xf32, #tpu.memory_space<vmem>>, vector<256x128xf32>
    tpu.vector_store %arg6[%c0_7, %c0_8], %7 {strides = array<i32>} : memref<256x128xf32, #tpu.memory_space<vmem>>, vector<256x128xf32>,
    %c0_9 = arith.constant 0 : index
    %c0_10 = arith.constant 0 : index
    %9 = vector.load %arg5[%c0_9, %c0_10] : memref<128x128xf32, #tpu.memory_space<vmem>>, vector<128x128xf32>
    %cst_11 = arith.constant dense<0.000000e+00> : vector<256x128xf32>
    %10 = tpu.matmul %7, %9, %cst_11 {dimension_numbers = #tpu.dot_dimension_numbers<[1], [0], [0], [1], [0, 0, 1, 1], [], []>} : vector<256x128xf32>, vector<128x128xf32>, vector<256x128xf32> -> vector<256x128xf32>
    %11 = arith.truncf %10 : vector<256x128xf32> to vector<256x128xbf16>
    %c0_12 = arith.constant 0 : index
    %c0_13 = arith.constant 0 : index
    %12 = vector.load %arg7[%c0_12, %c0_13] : memref<256x128xbf16, #tpu.memory_space<vmem>>, vector<256x128xbf16>
    tpu.vector_store %arg7[%c0_12, %c0_13], %11 {strides = array<i32>} : memref<256x128xbf16, #tpu.memory_space<vmem>>, vector<256x128xbf16>,
    return
  }
  func.func @transform_0(%arg0: i32) -> (i32, i32) {
    %c0_i32 = arith.constant 0 : i32
    %c0_i32_0 = arith.constant 0 : i32
    return %arg0, %c0_i32 : i32, i32
  }
  func.func @transform_1(%arg0: i32) -> (i32, i32) {
    %c0_i32 = arith.constant 0 : i32
    %c0_i32_0 = arith.constant 0 : i32
    return %arg0, %c0_i32 : i32, i32
  }
  func.func @transform_2(%arg0: i32) -> (i32, i32) {
    %c0_i32 = arith.constant 0 : i32
    %c0_i32_0 = arith.constant 0 : i32
    %c0_i32_1 = arith.constant 0 : i32
    return %c0_i32, %c0_i32_0 : i32, i32
  }
  func.func @transform_3(%arg0: i32) -> (i32, i32) {
    %c0_i32 = arith.constant 0 : i32
    %c0_i32_0 = arith.constant 0 : i32
    %c0_i32_1 = arith.constant 0 : i32
    return %c0_i32, %c0_i32_0 : i32, i32
  }
  func.func @transform_4(%arg0: i32) -> (i32, i32) {
    %c0_i32 = arith.constant 0 : i32
    %c0_i32_0 = arith.constant 0 : i32
    %c0_i32_1 = arith.constant 0 : i32
    return %c0_i32, %c0_i32_0 : i32, i32
  }
  func.func @transform_5(%arg0: i32) -> (i32, i32) {
    %c0_i32 = arith.constant 0 : i32
    %c0_i32_0 = arith.constant 0 : i32
    return %arg0, %c0_i32 : i32, i32
  }
  func.func @transform_6(%arg0: i32) -> (i32, i32) {
    %c0_i32 = arith.constant 0 : i32
    %c0_i32_0 = arith.constant 0 : i32
    return %arg0, %c0_i32 : i32, i32
  }
}

</mosaic_0001>

<llo_original>
// kernel: tpu_custom_call.1
$region0: #{tpu_custom_call.1}
  #allocation0 [shape = 'u32[]', space=smem, size = 0x4, offset = 0x4, fixed_abs, tag = 'smem constant byte address 0x4 - core index']
  #allocation1 [shape = 'u32[144,128]{1,0:T(1,128)}', space=vmem, size = 0x12000, scoped, tag = 'internal scratch']
  %s0 = inlined_call_operand.vmem [shape: f32[512,128], index: 0, kind: input, shape index: {}]
  %s1 = inlined_call_operand.vmem [shape: f32[512,8], index: 1, kind: input, shape index: {}]
  %s2 = inlined_call_operand.vmem [shape: f32[8,128], index: 2, kind: input, shape index: {}]
  %s3 = inlined_call_operand.vmem [shape: f32[1,128], index: 3, kind: input, shape index: {}]
  %s4 = inlined_call_operand.hbm [shape: f32[128,128], index: 4, kind: input, shape index: {}]
  %s5 = inlined_call_operand.hbm [shape: f32[512,128], index: 5, kind: output, shape index: {0}]
  %s6 = inlined_call_operand.hbm [shape: bf16[512,128], index: 6, kind: output, shape index: {1}]
  %7 = xla_tuple %s5, %s6
  %s8 = sld [smem:[#allocation0]]
  $region65: #{tpu_custom_call.1} parent=0
    _
  %s10 = ssub.s32 1, %s8
  %s11 = scalar_select 0, %s10, %s8
  $region1: #{tpu_custom_call.1} parent=0
    #allocation2 [shape = 'u8[65536]{0}', space=vmem, size = 0x10000, scoped, tag = 'input window, operand 4, single buffered']
    #allocation3 [shape = 's32[2]{0}', space=sflag, size = 0x8, scoped, tag = 'scoped memory for tpu_custom_call.1']
    #allocation4 [shape = 's32[2]{0}', space=sflag, size = 0x8, scoped, tag = 'scoped memory for tpu_custom_call.1']
    #allocation5 [shape = 'u8[262144]{0}', space=vmem, size = 0x40000, scoped, tag = 'output window, operand 0']
    #allocation6 [shape = 'u8[131072]{0}', space=vmem, size = 0x20000, scoped, tag = 'output window, operand 1']
    #allocation7 [shape = 's32[2]{0}', space=sflag, size = 0x8, scoped, tag = 'scoped memory for tpu_custom_call.1']
    %12 = vsyncpa [#allocation3], 0
    %13 = vsyncpa [#allocation4], 0
    %s14 = scalar_lea.sflag [#allocation4], 1
    %15 = vsyncpa %s14, 0
    %16 = vsyncpa [#allocation7], 0
    %s17 = scalar_lea.sflag [#allocation7], 1
    %18 = vsyncpa %s17, 0
    loop: start=0, step=1, limit=4
    $region2: #{tpu_custom_call.1} parent=1 // loop_pre_header
      _
    $region3: #{tpu_custom_call.1} parent=1 // loop_header
      %s20 = sphi 0, %s24
      %p21 = scmp.ge.s32.totalorder %s20, 4
      %s30 = sphi 0, %s32
      %s33 = sphi 0, %s30
      %s34 = sphi 0, %s33
      %s50 = sphi 0, %s34
      %s56 = sphi 0, %s58
      %s59 = sphi 0, %s56
      %s60 = sphi 0, %s59
      %s76 = sphi 0, %s60
      %s80 = sphi 0, %s80
      %s82 = sphi 0, %s80
      %s83 = sphi 0, %s82
      %s97 = sphi 0, %s83
      %s101 = sphi 0, %s101
      %s103 = sphi 0, %s101
      %s104 = sphi 0, %s103
      %s118 = sphi 0, %s104
      %s122 = sphi 0, %s122
      %s124 = sphi 0, %s122
      %s125 = sphi 0, %s124
      %s139 = sphi 0, %s125
      %s145 = sphi 0, %s147
      %s148 = sphi 0, %s145
      %s149 = sphi 0, %s148
      %s165 = sphi 0, %s149
      %s171 = sphi 0, %s173
      %s174 = sphi 0, %s171
      %s175 = sphi 0, %s174
      %s191 = sphi 0, %s175
    $region4: #{tpu_custom_call.1} parent=1 // loop_header_branch
      %23 = sbr.rel (%p21) target = $region8
    $region5: #{tpu_custom_call.1} parent=1 // loop_body
      %s25 = ssub.s32 %s20, 1
      %s26 = ssub.s32 %s20, 2
      %s27 = sadd.s32 %s20, 1
      %s28 = ssub.s32 %s20, %s27
      %p29 = scmp.eq.s32.totalorder %s28, 0
      %s31 = sadd.s32 %s30, 1
      %s32 = scalar_select %p29, %s30, %s31
      %p35 = pneg %p29
      %p36 = scmp.eq.s32.totalorder %s20, 1
      %p37 = por %p35, %p36
      %p38 = scmp.ne.s32.totalorder %s30, %s33
      %p39 = scmp.eq.s32.totalorder %s20, 0
      %p40 = por %p38, %p39
      %p41 = scmp.ne.s32.totalorder %s30, %s33
      %p42 = scmp.eq.s32.totalorder %s25, 1
      %p43 = por %p41, %p42
      %p44 = scmp.ne.s32.totalorder %s33, %s34
      %p45 = scmp.eq.s32.totalorder %s25, 0
      %p46 = por %p44, %p45
      %p47 = scmp.ne.s32.totalorder %s33, %s34
      %p48 = scmp.eq.s32.totalorder %s26, 1
      %p49 = por %p47, %p48
      %p51 = scmp.ne.s32.totalorder %s34, %s50
      %p52 = scmp.eq.s32.totalorder %s26, 0
      %p53 = por %p51, %p52
      %s54 = ssub.s32 %s20, %s27
      %p55 = scmp.eq.s32.totalorder %s54, 0
      %s57 = sadd.s32 %s56, 1
      %s58 = scalar_select %p55, %s56, %s57
      %p61 = pneg %p55
      %p62 = scmp.eq.s32.totalorder %s20, 1
      %p63 = por %p61, %p62
      %p64 = scmp.ne.s32.totalorder %s56, %s59
      %p65 = scmp.eq.s32.totalorder %s20, 0
      %p66 = por %p64, %p65
      %p67 = scmp.ne.s32.totalorder %s56, %s59
      %p68 = scmp.eq.s32.totalorder %s25, 1
      %p69 = por %p67, %p68
      %p70 = scmp.ne.s32.totalorder %s59, %s60
      %p71 = scmp.eq.s32.totalorder %s25, 0
      %p72 = por %p70, %p71
      %p73 = scmp.ne.s32.totalorder %s59, %s60
      %p74 = scmp.eq.s32.totalorder %s26, 1
      %p75 = por %p73, %p74
      %p77 = scmp.ne.s32.totalorder %s60, %s76
      %p78 = scmp.eq.s32.totalorder %s26, 0
      %p79 = por %p77, %p78
      %s81 = sadd.s32 %s80, 1
      %p84 = scmp.eq.s32.totalorder %s20, 1
      %p85 = scmp.ne.s32.totalorder %s80, %s82
      %p86 = scmp.eq.s32.totalorder %s20, 0
      %p87 = por %p85, %p86
      %p88 = scmp.ne.s32.totalorder %s80, %s82
      %p89 = scmp.eq.s32.totalorder %s25, 1
      %p90 = por %p88, %p89
      %p91 = scmp.ne.s32.totalorder %s82, %s83
      %p92 = scmp.eq.s32.totalorder %s25, 0
      %p93 = por %p91, %p92
      %p94 = scmp.ne.s32.totalorder %s82, %s83
      %p95 = scmp.eq.s32.totalorder %s26, 1
      %p96 = por %p94, %p95
      %p98 = scmp.ne.s32.totalorder %s83, %s97
      %p99 = scmp.eq.s32.totalorder %s26, 0
      %p100 = por %p98, %p99
      %s102 = sadd.s32 %s101, 1
      %p105 = scmp.eq.s32.totalorder %s20, 1
      %p106 = scmp.ne.s32.totalorder %s101, %s103
      %p107 = scmp.eq.s32.totalorder %s20, 0
      %p108 = por %p106, %p107
      %p109 = scmp.ne.s32.totalorder %s101, %s103
      %p110 = scmp.eq.s32.totalorder %s25, 1
      %p111 = por %p109, %p110
      %p112 = scmp.ne.s32.totalorder %s103, %s104
      %p113 = scmp.eq.s32.totalorder %s25, 0
      %p114 = por %p112, %p113
      %p115 = scmp.ne.s32.totalorder %s103, %s104
      %p116 = scmp.eq.s32.totalorder %s26, 1
      %p117 = por %p115, %p116
      %p119 = scmp.ne.s32.totalorder %s104, %s118
      %p120 = scmp.eq.s32.totalorder %s26, 0
      %p121 = por %p119, %p120
      %s123 = sadd.s32 %s122, 1
      %p126 = scmp.eq.s32.totalorder %s20, 1
      %p127 = scmp.ne.s32.totalorder %s122, %s124
      %p128 = scmp.eq.s32.totalorder %s20, 0
      %p129 = por %p127, %p128
      %p130 = scmp.ne.s32.totalorder %s122, %s124
      %p131 = scmp.eq.s32.totalorder %s25, 1
      %p132 = por %p130, %p131
      %p133 = scmp.ne.s32.totalorder %s124, %s125
      %p134 = scmp.eq.s32.totalorder %s25, 0
      %p135 = por %p133, %p134
      %p136 = scmp.ne.s32.totalorder %s124, %s125
      %p137 = scmp.eq.s32.totalorder %s26, 1
      %p138 = por %p136, %p137
      %p140 = scmp.ne.s32.totalorder %s125, %s139
      %p141 = scmp.eq.s32.totalorder %s26, 0
      %p142 = por %p140, %p141
      %s143 = ssub.s32 %s20, %s27
      %p144 = scmp.eq.s32.totalorder %s143, 0
      %s146 = sadd.s32 %s145, 1
      %s147 = scalar_select %p144, %s145, %s146
      %p150 = pneg %p144
      %p151 = scmp.eq.s32.totalorder %s20, 1
      %p152 = por %p150, %p151
      %p153 = scmp.ne.s32.totalorder %s145, %s148
      %p154 = scmp.eq.s32.totalorder %s20, 0
      %p155 = por %p153, %p154
      %p156 = scmp.ne.s32.totalorder %s145, %s148
      %p157 = scmp.eq.s32.totalorder %s25, 1
      %p158 = por %p156, %p157
      %p159 = scmp.ne.s32.totalorder %s148, %s149
      %p160 = scmp.eq.s32.totalorder %s25, 0
      %p161 = por %p159, %p160
      %p162 = scmp.ne.s32.totalorder %s148, %s149
      %p163 = scmp.eq.s32.totalorder %s26, 1
      %p164 = por %p162, %p163
      %p166 = scmp.ne.s32.totalorder %s149, %s165
      %p167 = scmp.eq.s32.totalorder %s26, 0
      %p168 = por %p166, %p167
      %s169 = ssub.s32 %s20, %s27
      %p170 = scmp.eq.s32.totalorder %s169, 0
      %s172 = sadd.s32 %s171, 1
      %s173 = scalar_select %p170, %s171, %s172
      %p176 = pneg %p170
      %p177 = scmp.eq.s32.totalorder %s20, 1
      %p178 = por %p176, %p177
      %p179 = scmp.ne.s32.totalorder %s171, %s174
      %p180 = scmp.eq.s32.totalorder %s20, 0
      %p181 = por %p179, %p180
      %p182 = scmp.ne.s32.totalorder %s171, %s174
      %p183 = scmp.eq.s32.totalorder %s25, 1
      %p184 = por %p182, %p183
      %p185 = scmp.ne.s32.totalorder %s174, %s175
      %p186 = scmp.eq.s32.totalorder %s25, 0
      %p187 = por %p185, %p186
      %p188 = scmp.ne.s32.totalorder %s174, %s175
      %p189 = scmp.eq.s32.totalorder %s26, 1
      %p190 = por %p188, %p189
      %p192 = scmp.ne.s32.totalorder %s175, %s191
      %p193 = scmp.eq.s32.totalorder %s26, 0
      %p194 = por %p192, %p193
      %p195 = scmp.le.s32.totalorder 1, %s20
      %p196 = scmp.lt.s32.totalorder %s20, 3
      %p197 = pnand %p195, %p196
      %p198 = pneg %p197
      // Predicated region
      $region9: #{tpu_custom_call.1} parent=5 // pred_check
        _
      $region10: #{tpu_custom_call.1} parent=5 // pred_check_branch
        %200 = sbr.rel (%p197) target = $region12
      $region11: #{tpu_custom_call.1} parent=5 // pred_region
        %s201 = ssub.s32 %s20, 1
        // Predicated region
        $region13: #{tpu_custom_call.1} parent=11 // pred_check
          %p202 = pneg %p93
        $region14: #{tpu_custom_call.1} parent=11 // pred_check_branch
          %204 = sbr.rel (%p202) target = $region16
        $region15: #{tpu_custom_call.1} parent=11 // pred_region
          _
        $region16: #{tpu_custom_call.1} parent=11 // pred_fallthru
          _
        // Predicated region
        $region17: #{tpu_custom_call.1} parent=11 // pred_check
          %p205 = pneg %p114
        $region18: #{tpu_custom_call.1} parent=11 // pred_check_branch
          %207 = sbr.rel (%p205) target = $region20
        $region19: #{tpu_custom_call.1} parent=11 // pred_region
          _
        $region20: #{tpu_custom_call.1} parent=11 // pred_fallthru
          _
        // Predicated region
        $region21: #{tpu_custom_call.1} parent=11 // pred_check
          %p208 = pneg %p135
        $region22: #{tpu_custom_call.1} parent=11 // pred_check_branch
          %210 = sbr.rel (%p208) target = $region24
        $region23: #{tpu_custom_call.1} parent=11 // pred_region
          %s212 = ssub.s32 2048, 2048
          %213 = vsyncadd [#allocation3], %s212
          %s214 = sshll.u32 [#allocation2], 4
          %s215 = int_to_ptr.vmem [resolvable:$true] %s214
          %220 = dma.hbm_to_vmem [thread:$0]  %s4, 2048, %s215, [#allocation3], 128, 128, 8
        $region24: #{tpu_custom_call.1} parent=11 // pred_fallthru
          _
      $region12: #{tpu_custom_call.1} parent=5 // pred_fallthru
        _
      %p221 = scmp.lt.s32.totalorder %s20, 2
      // Predicated region
      $region25: #{tpu_custom_call.1} parent=5 // pred_check
        %p222 = pneg %p221
      $region26: #{tpu_custom_call.1} parent=5 // pred_check_branch
        %224 = sbr.rel (%p222) target = $region28
      $region27: #{tpu_custom_call.1} parent=5 // pred_region
        // Predicated region
        $region29: #{tpu_custom_call.1} parent=27 // pred_check
          %p225 = pneg %p40
        $region30: #{tpu_custom_call.1} parent=27 // pred_check_branch
          %227 = sbr.rel (%p225) target = $region32
        $region31: #{tpu_custom_call.1} parent=27 // pred_region
          %s228 = smul.u32 32, %s20
          %p229 = scmp.lt.s32.totalorder %s228, 63
          %s230 = scalar_select %p229, %s228, 63
          %s231 = smul.addr %s230, 8
          %s232 = scalar_lea.vmem %s0, %s231
          %s233 = smul.u32 32, %s20
        $region32: #{tpu_custom_call.1} parent=27 // pred_fallthru
          _
        // Predicated region
        $region33: #{tpu_custom_call.1} parent=27 // pred_check
          %p234 = pneg %p66
        $region34: #{tpu_custom_call.1} parent=27 // pred_check_branch
          %236 = sbr.rel (%p234) target = $region36
        $region35: #{tpu_custom_call.1} parent=27 // pred_region
          %s237 = smul.u32 32, %s20
          %p238 = scmp.lt.s32.totalorder %s237, 63
          %s239 = scalar_select %p238, %s237, 63
          %s240 = smul.addr %s239, 8
          %s241 = scalar_lea.vmem %s1, %s240
          %s242 = smul.u32 32, %s20
        $region36: #{tpu_custom_call.1} parent=27 // pred_fallthru
          _
      $region28: #{tpu_custom_call.1} parent=5 // pred_fallthru
        _
      %p243 = scmp.le.s32.totalorder 1, %s20
      %p244 = scmp.lt.s32.totalorder %s20, 3
      %p245 = pnand %p243, %p244
      %p246 = pneg %p245
      // Predicated region
      $region37: #{tpu_custom_call.1} parent=5 // pred_check
        _
      $region38: #{tpu_custom_call.1} parent=5 // pred_check_branch
        %248 = sbr.rel (%p245) target = $region40
      $region39: #{tpu_custom_call.1} parent=5 // pred_region
        %s249 = ssub.s32 %s20, 1
        // Predicated region
        $region41: #{tpu_custom_call.1} parent=39 // pred_check
          %p250 = pneg %p135
        $region42: #{tpu_custom_call.1} parent=39 // pred_check_branch
          %252 = sbr.rel (%p250) target = $region44
        $region43: #{tpu_custom_call.1} parent=39 // pred_region
          %253 = dma.done [#allocation3], 2048
        $region44: #{tpu_custom_call.1} parent=39 // pred_fallthru
          _
        %s254 = smul.u32 32, %s25
        %p255 = scmp.lt.s32.totalorder %s254, 63
        %s256 = scalar_select %p255, %s254, 63
        %s257 = smul.addr %s256, 8
        %s258 = scalar_lea.vmem %s0, %s257
        %p259 = pneg %p46
        %p260 = pneg %p43
        %s261 = smul.u32 32, %s25
        %p262 = scmp.lt.s32.totalorder %s261, 63
        %s263 = scalar_select %p262, %s261, 63
        %s264 = smul.addr %s263, 8
        %s265 = scalar_lea.vmem %s1, %s264
        %p266 = pneg %p72
        %p267 = pneg %p69
        %p268 = pneg %p93
        %p269 = pneg %p90
        %p270 = pneg %p114
        %p271 = pneg %p111
        %p272 = pneg %p135
        %p273 = pneg %p132
        %p274 = pneg %p161
        %p275 = pneg %p158
        %s276 = sand.u32 %s148, 1
        %s277 = scalar_lea.sflag [#allocation4], %s276
        %s278 = sand.u32 %s148, 1
        %s279 = smul.addr %s278, 256
        %s280 = scalar_lea.vmem [#allocation5], %s279
        %p281 = pneg %p187
        %p282 = pneg %p184
        %s283 = sand.u32 %s174, 1
        %s284 = scalar_lea.sflag [#allocation7], %s283
        %s285 = sand.u32 %s174, 1
        %s286 = smul.addr %s285, 128
        %s287 = scalar_lea.vmem [#allocation6], %s286
        %s288 = smul.u32 32, %s25
        %p289 = scmp.lt.s32.totalorder %s288, 63
        %s290 = scalar_select %p289, %s288, 63
        %s291 = smul.addr %s290, 8
        %s292 = scalar_lea.vmem %s0, %s291
        %s293 = smul.u32 32, %s25
        %s294 = smul.u32 32, %s25
        %p295 = scmp.lt.s32.totalorder %s294, 63
        %s296 = scalar_select %p295, %s294, 63
        %s297 = smul.addr %s296, 8
        %s298 = scalar_lea.vmem %s1, %s297
        %s299 = smul.u32 32, %s25
        %s300 = smul.u32 32, %s25
        %s301 = smul.u32 32, %s25
        %v302 = vld [vmem:[%s292] sm:$0xff]
        %v303 = vld [vmem:[%s292 + $0x8] sm:$0xff]
        %v304 = vld [vmem:[%s292 + $0x10] sm:$0xff]
        %v305 = vld [vmem:[%s292 + $0x18] sm:$0xff]
        %v306 = vld [vmem:[%s292 + $0x20] sm:$0xff]
        %v307 = vld [vmem:[%s292 + $0x28] sm:$0xff]
        %v308 = vld [vmem:[%s292 + $0x30] sm:$0xff]
        %v309 = vld [vmem:[%s292 + $0x38] sm:$0xff]
        %v310 = vld [vmem:[%s292 + $0x40] sm:$0xff]
        %v311 = vld [vmem:[%s292 + $0x48] sm:$0xff]
        %v312 = vld [vmem:[%s292 + $0x50] sm:$0xff]
        %v313 = vld [vmem:[%s292 + $0x58] sm:$0xff]
        %v314 = vld [vmem:[%s292 + $0x60] sm:$0xff]
        %v315 = vld [vmem:[%s292 + $0x68] sm:$0xff]
        %v316 = vld [vmem:[%s292 + $0x70] sm:$0xff]
        %v317 = vld [vmem:[%s292 + $0x78] sm:$0xff]
        %v318 = vld [vmem:[%s292 + $0x80] sm:$0xff]
        %v319 = vld [vmem:[%s292 + $0x88] sm:$0xff]
        %v320 = vld [vmem:[%s292 + $0x90] sm:$0xff]
        %v321 = vld [vmem:[%s292 + $0x98] sm:$0xff]
        %v322 = vld [vmem:[%s292 + $0xa0] sm:$0xff]
        %v323 = vld [vmem:[%s292 + $0xa8] sm:$0xff]
        %v324 = vld [vmem:[%s292 + $0xb0] sm:$0xff]
        %v325 = vld [vmem:[%s292 + $0xb8] sm:$0xff]
        %v326 = vld [vmem:[%s292 + $0xc0] sm:$0xff]
        %v327 = vld [vmem:[%s292 + $0xc8] sm:$0xff]
        %v328 = vld [vmem:[%s292 + $0xd0] sm:$0xff]
        %v329 = vld [vmem:[%s292 + $0xd8] sm:$0xff]
        %v330 = vld [vmem:[%s292 + $0xe0] sm:$0xff]
        %v331 = vld [vmem:[%s292 + $0xe8] sm:$0xff]
        %v332 = vld [vmem:[%s292 + $0xf0] sm:$0xff]
        %v333 = vld [vmem:[%s292 + $0xf8] sm:$0xff]
        %v334 = vld [vmem:[%s298] sm:$0xff]
        %v335 = vld [vmem:[%s298 + $0x8] sm:$0xff]
        %v336 = vld [vmem:[%s298 + $0x10] sm:$0xff]
        %v337 = vld [vmem:[%s298 + $0x18] sm:$0xff]
        %v338 = vld [vmem:[%s298 + $0x20] sm:$0xff]
        %v339 = vld [vmem:[%s298 + $0x28] sm:$0xff]
        %v340 = vld [vmem:[%s298 + $0x30] sm:$0xff]
        %v341 = vld [vmem:[%s298 + $0x38] sm:$0xff]
        %v342 = vld [vmem:[%s298 + $0x40] sm:$0xff]
        %v343 = vld [vmem:[%s298 + $0x48] sm:$0xff]
        %v344 = vld [vmem:[%s298 + $0x50] sm:$0xff]
        %v345 = vld [vmem:[%s298 + $0x58] sm:$0xff]
        %v346 = vld [vmem:[%s298 + $0x60] sm:$0xff]
        %v347 = vld [vmem:[%s298 + $0x68] sm:$0xff]
        %v348 = vld [vmem:[%s298 + $0x70] sm:$0xff]
        %v349 = vld [vmem:[%s298 + $0x78] sm:$0xff]
        %v350 = vld [vmem:[%s298 + $0x80] sm:$0xff]
        %v351 = vld [vmem:[%s298 + $0x88] sm:$0xff]
        %v352 = vld [vmem:[%s298 + $0x90] sm:$0xff]
        %v353 = vld [vmem:[%s298 + $0x98] sm:$0xff]
        %v354 = vld [vmem:[%s298 + $0xa0] sm:$0xff]
        %v355 = vld [vmem:[%s298 + $0xa8] sm:$0xff]
        %v356 = vld [vmem:[%s298 + $0xb0] sm:$0xff]
        %v357 = vld [vmem:[%s298 + $0xb8] sm:$0xff]
        %v358 = vld [vmem:[%s298 + $0xc0] sm:$0xff]
        %v359 = vld [vmem:[%s298 + $0xc8] sm:$0xff]
        %v360 = vld [vmem:[%s298 + $0xd0] sm:$0xff]
        %v361 = vld [vmem:[%s298 + $0xd8] sm:$0xff]
        %v362 = vld [vmem:[%s298 + $0xe0] sm:$0xff]
        %v363 = vld [vmem:[%s298 + $0xe8] sm:$0xff]
        %v364 = vld [vmem:[%s298 + $0xf0] sm:$0xff]
        %v365 = vld [vmem:[%s298 + $0xf8] sm:$0xff]
        %v366 = vld [vmem:[%s2] sm:$0xff]
        %vm367 = vcmask 64512
        %v369 = vsel %vm367, %v334, 0
        %v372 = vsel %vm367, %v335, 0
        %v375 = vsel %vm367, %v336, 0
        %v378 = vsel %vm367, %v337, 0
        %v381 = vsel %vm367, %v338, 0
        %v384 = vsel %vm367, %v339, 0
        %v387 = vsel %vm367, %v340, 0
        %v390 = vsel %vm367, %v341, 0
        %v393 = vsel %vm367, %v342, 0
        %v396 = vsel %vm367, %v343, 0
        %v399 = vsel %vm367, %v344, 0
        %v402 = vsel %vm367, %v345, 0
        %v405 = vsel %vm367, %v346, 0
        %v408 = vsel %vm367, %v347, 0
        %v411 = vsel %vm367, %v348, 0
        %v414 = vsel %vm367, %v349, 0
        %v417 = vsel %vm367, %v350, 0
        %v420 = vsel %vm367, %v351, 0
        %v423 = vsel %vm367, %v352, 0
        %v426 = vsel %vm367, %v353, 0
        %v429 = vsel %vm367, %v354, 0
        %v432 = vsel %vm367, %v355, 0
        %v435 = vsel %vm367, %v356, 0
        %v438 = vsel %vm367, %v357, 0
        %v441 = vsel %vm367, %v358, 0
        %v444 = vsel %vm367, %v359, 0
        %v447 = vsel %vm367, %v360, 0
        %v450 = vsel %vm367, %v361, 0
        %v453 = vsel %vm367, %v362, 0
        %v456 = vsel %vm367, %v363, 0
        %v459 = vsel %vm367, %v364, 0
        %v462 = vsel %vm367, %v365, 0
        %464 = vmatprep.subr.mxu0 0.0
        %465 = vmatpush1.msra.mxu0 %v366
        %466 = vmatprep.subr.mxu0 0.0
        %467 = vmatpush1.msra.mxu0 0.0
        %468 = vmatprep.subr.mxu0 0.0
        %469 = vmatpush1.msra.mxu0 0.0
        %470 = vmatprep.subr.mxu0 0.0
        %471 = vmatpush1.msra.mxu0 0.0
        %472 = vmatprep.subr.mxu0 0.0
        %473 = vmatpush1.msra.mxu0 0.0
        %474 = vmatprep.subr.mxu0 0.0
        %475 = vmatpush1.msra.mxu0 0.0
        %476 = vmatprep.subr.mxu0 0.0
        %477 = vmatpush1.msra.mxu0 0.0
        %478 = vmatprep.subr.mxu0 0.0
        %479 = vmatpush1.msra.mxu0 0.0
        %480 = vmatprep.subr.mxu0 0.0
        %481 = vmatpush1.msra.mxu0 0.0
        %482 = vmatprep.subr.mxu0 0.0
        %483 = vmatpush1.msra.mxu0 0.0
        %484 = vmatprep.subr.mxu0 0.0
        %485 = vmatpush1.msra.mxu0 0.0
        %486 = vmatprep.subr.mxu0 0.0
        %487 = vmatpush1.msra.mxu0 0.0
        %488 = vmatprep.subr.mxu0 0.0
        %489 = vmatpush1.msra.mxu0 0.0
        %490 = vmatprep.subr.mxu0 0.0
        %491 = vmatpush1.msra.mxu0 0.0
        %492 = vmatprep.subr.mxu0 0.0
        %493 = vmatpush1.msra.mxu0 0.0
        %494 = vmatprep.subr.mxu0 0.0
        %495 = vmatpush1.msra.mxu0 0.0
        %496 = vmatprep.subr.mxu0 0.0
        %497 = vmatpush1.msra.mxu0 0.0
        %498 = vmatprep.subr.mxu0 0.0
        %499 = vmatpush1.msra.mxu0 0.0
        %500 = vmatprep.subr.mxu0 0.0
        %501 = vmatpush1.msra.mxu0 0.0
        %502 = vmatprep.subr.mxu0 0.0
        %503 = vmatpush1.msra.mxu0 0.0
        %504 = vmatprep.subr.mxu0 0.0
        %505 = vmatpush1.msra.mxu0 0.0
        %506 = vmatprep.subr.mxu0 0.0
        %507 = vmatpush1.msra.mxu0 0.0
        %508 = vmatprep.subr.mxu0 0.0
        %509 = vmatpush1.msra.mxu0 0.0
        %510 = vmatprep.subr.mxu0 0.0
        %511 = vmatpush1.msra.mxu0 0.0
        %512 = vmatprep.subr.mxu0 0.0
        %513 = vmatpush1.msra.mxu0 0.0
        %514 = vmatprep.subr.mxu0 0.0
        %515 = vmatpush1.msra.mxu0 0.0
        %516 = vmatprep.subr.mxu0 0.0
        %517 = vmatpush1.msra.mxu0 0.0
        %518 = vmatprep.subr.mxu0 0.0
        %519 = vmatpush1.msra.mxu0 0.0
        %520 = vmatprep.subr.mxu0 0.0
        %521 = vmatpush1.msra.mxu0 0.0
        %522 = vmatprep.subr.mxu0 0.0
        %523 = vmatpush1.msra.mxu0 0.0
        %524 = vmatprep.subr.mxu0 0.0
        %525 = vmatpush1.msra.mxu0 0.0
        %526 = vmatprep.subr.mxu0 0.0
        %527 = vmatpush1.msra.mxu0 0.0
        %528 = vmatprep.mubr.f32.mxu0 0.0
        %529 = vmatmul.mubr.f32.gmra.mrb[0].mxu0 %v369
        %v530 = vpop.f32.mrb[0].mxu0
        %v531 = vadd.f32 0.0, %v530
        %v532 = vpop.f32.mrb[0].mxu0
        %533 = vmatprep.mubr.f32.mxu0 0.0
        %534 = vmatmul.mubr.f32.gmra.mrb[0].mxu0 %v372
        %v535 = vpop.f32.mrb[0].mxu0
        %v536 = vadd.f32 0.0, %v535
        %v537 = vpop.f32.mrb[0].mxu0
        %538 = vmatprep.mubr.f32.mxu0 0.0
        %539 = vmatmul.mubr.f32.gmra.mrb[0].mxu0 %v375
        %v540 = vpop.f32.mrb[0].mxu0
        %v541 = vadd.f32 0.0, %v540
        %v542 = vpop.f32.mrb[0].mxu0
        %543 = vmatprep.mubr.f32.mxu0 0.0
        %544 = vmatmul.mubr.f32.gmra.mrb[0].mxu0 %v378
        %v545 = vpop.f32.mrb[0].mxu0
        %v546 = vadd.f32 0.0, %v545
        %v547 = vpop.f32.mrb[0].mxu0
        %548 = vmatprep.mubr.f32.mxu0 0.0
        %549 = vmatmul.mubr.f32.gmra.mrb[0].mxu0 %v381
        %v550 = vpop.f32.mrb[0].mxu0
        %v551 = vadd.f32 0.0, %v550
        %v552 = vpop.f32.mrb[0].mxu0
        %553 = vmatprep.mubr.f32.mxu0 0.0
        %554 = vmatmul.mubr.f32.gmra.mrb[0].mxu0 %v384
        %v555 = vpop.f32.mrb[0].mxu0
        %v556 = vadd.f32 0.0, %v555
        %v557 = vpop.f32.mrb[0].mxu0
        %558 = vmatprep.mubr.f32.mxu0 0.0
        %559 = vmatmul.mubr.f32.gmra.mrb[0].mxu0 %v387
        %v560 = vpop.f32.mrb[0].mxu0
        %v561 = vadd.f32 0.0, %v560
        %v562 = vpop.f32.mrb[0].mxu0
        %563 = vmatprep.mubr.f32.mxu0 0.0
        %564 = vmatmul.mubr.f32.gmra.mrb[0].mxu0 %v390
        %v565 = vpop.f32.mrb[0].mxu0
        %v566 = vadd.f32 0.0, %v565
        %v567 = vpop.f32.mrb[0].mxu0
        %568 = vmatprep.mubr.f32.mxu0 0.0
        %569 = vmatmul.mubr.f32.gmra.mrb[0].mxu0 %v393
        %v570 = vpop.f32.mrb[0].mxu0
        %v571 = vadd.f32 0.0, %v570
        %v572 = vpop.f32.mrb[0].mxu0
        %573 = vmatprep.mubr.f32.mxu0 0.0
        %574 = vmatmul.mubr.f32.gmra.mrb[0].mxu0 %v396
        %v575 = vpop.f32.mrb[0].mxu0
        %v576 = vadd.f32 0.0, %v575
        %v577 = vpop.f32.mrb[0].mxu0
        %578 = vmatprep.mubr.f32.mxu0 0.0
        %579 = vmatmul.mubr.f32.gmra.mrb[0].mxu0 %v399
        %v580 = vpop.f32.mrb[0].mxu0
        %v581 = vadd.f32 0.0, %v580
        %v582 = vpop.f32.mrb[0].mxu0
        %583 = vmatprep.mubr.f32.mxu0 0.0
        %584 = vmatmul.mubr.f32.gmra.mrb[0].mxu0 %v402
        %v585 = vpop.f32.mrb[0].mxu0
        %v586 = vadd.f32 0.0, %v585
        %v587 = vpop.f32.mrb[0].mxu0
        %588 = vmatprep.mubr.f32.mxu0 0.0
        %589 = vmatmul.mubr.f32.gmra.mrb[0].mxu0 %v405
        %v590 = vpop.f32.mrb[0].mxu0
        %v591 = vadd.f32 0.0, %v590
        %v592 = vpop.f32.mrb[0].mxu0
        %593 = vmatprep.mubr.f32.mxu0 0.0
        %594 = vmatmul.mubr.f32.gmra.mrb[0].mxu0 %v408
        %v595 = vpop.f32.mrb[0].mxu0
        %v596 = vadd.f32 0.0, %v595
        %v597 = vpop.f32.mrb[0].mxu0
        %598 = vmatprep.mubr.f32.mxu0 0.0
        %599 = vmatmul.mubr.f32.gmra.mrb[0].mxu0 %v411
        %v600 = vpop.f32.mrb[0].mxu0
        %v601 = vadd.f32 0.0, %v600
        %v602 = vpop.f32.mrb[0].mxu0
        %603 = vmatprep.mubr.f32.mxu0 0.0
        %604 = vmatmul.mubr.f32.gmra.mrb[0].mxu0 %v414
        %v605 = vpop.f32.mrb[0].mxu0
        %v606 = vadd.f32 0.0, %v605
        %v607 = vpop.f32.mrb[0].mxu0
        %608 = vmatprep.mubr.f32.mxu0 0.0
        %609 = vmatmul.mubr.f32.gmra.mrb[0].mxu0 %v417
        %v610 = vpop.f32.mrb[0].mxu0
        %v611 = vadd.f32 0.0, %v610
        %v612 = vpop.f32.mrb[0].mxu0
        %613 = vmatprep.mubr.f32.mxu0 0.0
        %614 = vmatmul.mubr.f32.gmra.mrb[0].mxu0 %v420
        %v615 = vpop.f32.mrb[0].mxu0
        %v616 = vadd.f32 0.0, %v615
        %v617 = vpop.f32.mrb[0].mxu0
        %618 = vmatprep.mubr.f32.mxu0 0.0
        %619 = vmatmul.mubr.f32.gmra.mrb[0].mxu0 %v423
        %v620 = vpop.f32.mrb[0].mxu0
        %v621 = vadd.f32 0.0, %v620
        %v622 = vpop.f32.mrb[0].mxu0
        %623 = vmatprep.mubr.f32.mxu0 0.0
        %624 = vmatmul.mubr.f32.gmra.mrb[0].mxu0 %v426
        %v625 = vpop.f32.mrb[0].mxu0
        %v626 = vadd.f32 0.0, %v625
        %v627 = vpop.f32.mrb[0].mxu0
        %628 = vmatprep.mubr.f32.mxu0 0.0
        %629 = vmatmul.mubr.f32.gmra.mrb[0].mxu0 %v429
        %v630 = vpop.f32.mrb[0].mxu0
        %v631 = vadd.f32 0.0, %v630
        %v632 = vpop.f32.mrb[0].mxu0
        %633 = vmatprep.mubr.f32.mxu0 0.0
        %634 = vmatmul.mubr.f32.gmra.mrb[0].mxu0 %v432
        %v635 = vpop.f32.mrb[0].mxu0
        %v636 = vadd.f32 0.0, %v635
        %v637 = vpop.f32.mrb[0].mxu0
        %638 = vmatprep.mubr.f32.mxu0 0.0
        %639 = vmatmul.mubr.f32.gmra.mrb[0].mxu0 %v435
        %v640 = vpop.f32.mrb[0].mxu0
        %v641 = vadd.f32 0.0, %v640
        %v642 = vpop.f32.mrb[0].mxu0
        %643 = vmatprep.mubr.f32.mxu0 0.0
        %644 = vmatmul.mubr.f32.gmra.mrb[0].mxu0 %v438
        %v645 = vpop.f32.mrb[0].mxu0
        %v646 = vadd.f32 0.0, %v645
        %v647 = vpop.f32.mrb[0].mxu0
        %648 = vmatprep.mubr.f32.mxu0 0.0
        %649 = vmatmul.mubr.f32.gmra.mrb[0].mxu0 %v441
        %v650 = vpop.f32.mrb[0].mxu0
        %v651 = vadd.f32 0.0, %v650
        %v652 = vpop.f32.mrb[0].mxu0
        %653 = vmatprep.mubr.f32.mxu0 0.0
        %654 = vmatmul.mubr.f32.gmra.mrb[0].mxu0 %v444
        %v655 = vpop.f32.mrb[0].mxu0
        %v656 = vadd.f32 0.0, %v655
        %v657 = vpop.f32.mrb[0].mxu0
        %658 = vmatprep.mubr.f32.mxu0 0.0
        %659 = vmatmul.mubr.f32.gmra.mrb[0].mxu0 %v447
        %v660 = vpop.f32.mrb[0].mxu0
        %v661 = vadd.f32 0.0, %v660
        %v662 = vpop.f32.mrb[0].mxu0
        %663 = vmatprep.mubr.f32.mxu0 0.0
        %664 = vmatmul.mubr.f32.gmra.mrb[0].mxu0 %v450
        %v665 = vpop.f32.mrb[0].mxu0
        %v666 = vadd.f32 0.0, %v665
        %v667 = vpop.f32.mrb[0].mxu0
        %668 = vmatprep.mubr.f32.mxu0 0.0
        %669 = vmatmul.mubr.f32.gmra.mrb[0].mxu0 %v453
        %v670 = vpop.f32.mrb[0].mxu0
        %v671 = vadd.f32 0.0, %v670
        %v672 = vpop.f32.mrb[0].mxu0
        %673 = vmatprep.mubr.f32.mxu0 0.0
        %674 = vmatmul.mubr.f32.gmra.mrb[0].mxu0 %v456
        %v675 = vpop.f32.mrb[0].mxu0
        %v676 = vadd.f32 0.0, %v675
        %v677 = vpop.f32.mrb[0].mxu0
        %678 = vmatprep.mubr.f32.mxu0 0.0
        %679 = vmatmul.mubr.f32.gmra.mrb[0].mxu0 %v459
        %v680 = vpop.f32.mrb[0].mxu0
        %v681 = vadd.f32 0.0, %v680
        %v682 = vpop.f32.mrb[0].mxu0
        %683 = vmatprep.mubr.f32.mxu0 0.0
        %684 = vmatmul.mubr.f32.gmra.mrb[0].mxu0 %v462
        %v685 = vpop.f32.mrb[0].mxu0
        %v686 = vadd.f32 0.0, %v685
        %v687 = vpop.f32.mrb[0].mxu0
        %688 = vdwg.mxu0
        %v689 = vadd.f32 %v302, %v531
        %v690 = vadd.f32 %v303, %v536
        %v691 = vadd.f32 %v304, %v541
        %v692 = vadd.f32 %v305, %v546
        %v693 = vadd.f32 %v306, %v551
        %v694 = vadd.f32 %v307, %v556
        %v695 = vadd.f32 %v308, %v561
        %v696 = vadd.f32 %v309, %v566
        %v697 = vadd.f32 %v310, %v571
        %v698 = vadd.f32 %v311, %v576
        %v699 = vadd.f32 %v312, %v581
        %v700 = vadd.f32 %v313, %v586
        %v701 = vadd.f32 %v314, %v591
        %v702 = vadd.f32 %v315, %v596
        %v703 = vadd.f32 %v316, %v601
        %v704 = vadd.f32 %v317, %v606
        %v705 = vadd.f32 %v318, %v611
        %v706 = vadd.f32 %v319, %v616
        %v707 = vadd.f32 %v320, %v621
        %v708 = vadd.f32 %v321, %v626
        %v709 = vadd.f32 %v322, %v631
        %v710 = vadd.f32 %v323, %v636
        %v711 = vadd.f32 %v324, %v641
        %v712 = vadd.f32 %v325, %v646
        %v713 = vadd.f32 %v326, %v651
        %v714 = vadd.f32 %v327, %v656
        %v715 = vadd.f32 %v328, %v661
        %v716 = vadd.f32 %v329, %v666
        %v717 = vadd.f32 %v330, %v671
        %v718 = vadd.f32 %v331, %v676
        %v719 = vadd.f32 %v332, %v681
        %v720 = vadd.f32 %v333, %v686
        %v721 = vld [vmem:[%s3] sm:$0x1]
        %v723 = vlaneseq
        %v724 = vshrl.u32 %v723, 7
        %v725 = vsub.s32 0, %v724
        %v726 = vrot.slane %v721, %v725
        %v728 = vadd.f32 %v689, %v726
        %v729 = vadd.f32 %v690, %v726
        %v730 = vadd.f32 %v691, %v726
        %v731 = vadd.f32 %v692, %v726
        %v732 = vadd.f32 %v693, %v726
        %v733 = vadd.f32 %v694, %v726
        %v734 = vadd.f32 %v695, %v726
        %v735 = vadd.f32 %v696, %v726
        %v736 = vadd.f32 %v697, %v726
        %v737 = vadd.f32 %v698, %v726
        %v738 = vadd.f32 %v699, %v726
        %v739 = vadd.f32 %v700, %v726
        %v740 = vadd.f32 %v701, %v726
        %v741 = vadd.f32 %v702, %v726
        %v742 = vadd.f32 %v703, %v726
        %v743 = vadd.f32 %v704, %v726
        %v744 = vadd.f32 %v705, %v726
        %v745 = vadd.f32 %v706, %v726
        %v746 = vadd.f32 %v707, %v726
        %v747 = vadd.f32 %v708, %v726
        %v748 = vadd.f32 %v709, %v726
        %v749 = vadd.f32 %v710, %v726
        %v750 = vadd.f32 %v711, %v726
        %v751 = vadd.f32 %v712, %v726
        %v752 = vadd.f32 %v713, %v726
        %v753 = vadd.f32 %v714, %v726
        %v754 = vadd.f32 %v715, %v726
        %v755 = vadd.f32 %v716, %v726
        %v756 = vadd.f32 %v717, %v726
        %v757 = vadd.f32 %v718, %v726
        %v758 = vadd.f32 %v719, %v726
        %v759 = vadd.f32 %v720, %v726
        %760 = vst [vmem:[%s280] sm:$0xff] %v728
        %761 = vst [vmem:[%s280 + $0x8] sm:$0xff] %v729
        %762 = vst [vmem:[%s280 + $0x10] sm:$0xff] %v730
        %763 = vst [vmem:[%s280 + $0x18] sm:$0xff] %v731
        %764 = vst [vmem:[%s280 + $0x20] sm:$0xff] %v732
        %765 = vst [vmem:[%s280 + $0x28] sm:$0xff] %v733
        %766 = vst [vmem:[%s280 + $0x30] sm:$0xff] %v734
        %767 = vst [vmem:[%s280 + $0x38] sm:$0xff] %v735
        %768 = vst [vmem:[%s280 + $0x40] sm:$0xff] %v736
        %769 = vst [vmem:[%s280 + $0x48] sm:$0xff] %v737
        %770 = vst [vmem:[%s280 + $0x50] sm:$0xff] %v738
        %771 = vst [vmem:[%s280 + $0x58] sm:$0xff] %v739
        %772 = vst [vmem:[%s280 + $0x60] sm:$0xff] %v740
        %773 = vst [vmem:[%s280 + $0x68] sm:$0xff] %v741
        %774 = vst [vmem:[%s280 + $0x70] sm:$0xff] %v742
        %775 = vst [vmem:[%s280 + $0x78] sm:$0xff] %v743
        %776 = vst [vmem:[%s280 + $0x80] sm:$0xff] %v744
        %777 = vst [vmem:[%s280 + $0x88] sm:$0xff] %v745
        %778 = vst [vmem:[%s280 + $0x90] sm:$0xff] %v746
        %779 = vst [vmem:[%s280 + $0x98] sm:$0xff] %v747
        %780 = vst [vmem:[%s280 + $0xa0] sm:$0xff] %v748
        %781 = vst [vmem:[%s280 + $0xa8] sm:$0xff] %v749
        %782 = vst [vmem:[%s280 + $0xb0] sm:$0xff] %v750
        %783 = vst [vmem:[%s280 + $0xb8] sm:$0xff] %v751
        %784 = vst [vmem:[%s280 + $0xc0] sm:$0xff] %v752
        %785 = vst [vmem:[%s280 + $0xc8] sm:$0xff] %v753
        %786 = vst [vmem:[%s280 + $0xd0] sm:$0xff] %v754
        %787 = vst [vmem:[%s280 + $0xd8] sm:$0xff] %v755
        %788 = vst [vmem:[%s280 + $0xe0] sm:$0xff] %v756
        %789 = vst [vmem:[%s280 + $0xe8] sm:$0xff] %v757
        %790 = vst [vmem:[%s280 + $0xf0] sm:$0xff] %v758
        %791 = vst [vmem:[%s280 + $0xf8] sm:$0xff] %v759
        %v792 = vld [vmem:[#allocation2] sm:$0xff]
        %v793 = vld [vmem:[#allocation2 + $0x8] sm:$0xff]
        %v794 = vld [vmem:[#allocation2 + $0x10] sm:$0xff]
        %v795 = vld [vmem:[#allocation2 + $0x18] sm:$0xff]
        %v796 = vld [vmem:[#allocation2 + $0x20] sm:$0xff]
        %v797 = vld [vmem:[#allocation2 + $0x28] sm:$0xff]
        %v798 = vld [vmem:[#allocation2 + $0x30] sm:$0xff]
        %v799 = vld [vmem:[#allocation2 + $0x38] sm:$0xff]
        %v800 = vld [vmem:[#allocation2 + $0x40] sm:$0xff]
        %v801 = vld [vmem:[#allocation2 + $0x48] sm:$0xff]
        %v802 = vld [vmem:[#allocation2 + $0x50] sm:$0xff]
        %v803 = vld [vmem:[#allocation2 + $0x58] sm:$0xff]
        %v804 = vld [vmem:[#allocation2 + $0x60] sm:$0xff]
        %v805 = vld [vmem:[#allocation2 + $0x68] sm:$0xff]
        %v806 = vld [vmem:[#allocation2 + $0x70] sm:$0xff]
        %v807 = vld [vmem:[#allocation2 + $0x78] sm:$0xff]
        %808 = vmatprep.subr.mxu0 0.0
        %809 = vmatpush1.msra.mxu0 %v792
        %810 = vmatprep.subr.mxu0 0.0
        %811 = vmatpush1.msra.mxu0 %v793
        %812 = vmatprep.subr.mxu0 0.0
        %813 = vmatpush1.msra.mxu0 %v794
        %814 = vmatprep.subr.mxu0 0.0
        %815 = vmatpush1.msra.mxu0 %v795
        %816 = vmatprep.subr.mxu0 0.0
        %817 = vmatpush1.msra.mxu0 %v796
        %818 = vmatprep.subr.mxu0 0.0
        %819 = vmatpush1.msra.mxu0 %v797
        %820 = vmatprep.subr.mxu0 0.0
        %821 = vmatpush1.msra.mxu0 %v798
        %822 = vmatprep.subr.mxu0 0.0
        %823 = vmatpush1.msra.mxu0 %v799
        %824 = vmatprep.subr.mxu0 0.0
        %825 = vmatpush1.msra.mxu0 %v800
        %826 = vmatprep.subr.mxu0 0.0
        %827 = vmatpush1.msra.mxu0 %v801
        %828 = vmatprep.subr.mxu0 0.0
        %829 = vmatpush1.msra.mxu0 %v802
        %830 = vmatprep.subr.mxu0 0.0
        %831 = vmatpush1.msra.mxu0 %v803
        %832 = vmatprep.subr.mxu0 0.0
        %833 = vmatpush1.msra.mxu0 %v804
        %834 = vmatprep.subr.mxu0 0.0
        %835 = vmatpush1.msra.mxu0 %v805
        %836 = vmatprep.subr.mxu0 0.0
        %837 = vmatpush1.msra.mxu0 %v806
        %838 = vmatprep.subr.mxu0 0.0
        %839 = vmatpush1.msra.mxu0 %v807
        %840 = vmatprep.subr.mxu0 0.0
        %841 = vmatpush1.msra.mxu0 0.0
        %842 = vmatprep.subr.mxu0 0.0
        %843 = vmatpush1.msra.mxu0 0.0
        %844 = vmatprep.subr.mxu0 0.0
        %845 = vmatpush1.msra.mxu0 0.0
        %846 = vmatprep.subr.mxu0 0.0
        %847 = vmatpush1.msra.mxu0 0.0
        %848 = vmatprep.subr.mxu0 0.0
        %849 = vmatpush1.msra.mxu0 0.0
        %850 = vmatprep.subr.mxu0 0.0
        %851 = vmatpush1.msra.mxu0 0.0
        %852 = vmatprep.subr.mxu0 0.0
        %853 = vmatpush1.msra.mxu0 0.0
        %854 = vmatprep.subr.mxu0 0.0
        %855 = vmatpush1.msra.mxu0 0.0
        %856 = vmatprep.subr.mxu0 0.0
        %857 = vmatpush1.msra.mxu0 0.0
        %858 = vmatprep.subr.mxu0 0.0
        %859 = vmatpush1.msra.mxu0 0.0
        %860 = vmatprep.subr.mxu0 0.0
        %861 = vmatpush1.msra.mxu0 0.0
        %862 = vmatprep.subr.mxu0 0.0
        %863 = vmatpush1.msra.mxu0 0.0
        %864 = vmatprep.subr.mxu0 0.0
        %865 = vmatpush1.msra.mxu0 0.0
        %866 = vmatprep.subr.mxu0 0.0
        %867 = vmatpush1.msra.mxu0 0.0
        %868 = vmatprep.subr.mxu0 0.0
        %869 = vmatpush1.msra.mxu0 0.0
        %870 = vmatprep.subr.mxu0 0.0
        %871 = vmatpush1.msra.mxu0 0.0
        %872 = vmatprep.mubr.f32.mxu0 0.0
        %873 = vmatmul.mubr.f32.gmra.mrb[0].mxu0 %v728
        %v874 = vpop.f32.mrb[0].mxu0
        %v875 = vadd.f32 0.0, %v874
        %v876 = vpop.f32.mrb[0].mxu0
        %877 = vmatprep.mubr.f32.mxu0 0.0
        %878 = vmatmul.mubr.f32.gmra.mrb[0].mxu0 %v729
        %v879 = vpop.f32.mrb[0].mxu0
        %v880 = vadd.f32 0.0, %v879
        %v881 = vpop.f32.mrb[0].mxu0
        %882 = vmatprep.mubr.f32.mxu0 0.0
        %883 = vmatmul.mubr.f32.gmra.mrb[0].mxu0 %v730
        %v884 = vpop.f32.mrb[0].mxu0
        %v885 = vadd.f32 0.0, %v884
        %v886 = vpop.f32.mrb[0].mxu0
        %887 = vmatprep.mubr.f32.mxu0 0.0
        %888 = vmatmul.mubr.f32.gmra.mrb[0].mxu0 %v731
        %v889 = vpop.f32.mrb[0].mxu0
        %v890 = vadd.f32 0.0, %v889
        %v891 = vpop.f32.mrb[0].mxu0
        %892 = vmatprep.mubr.f32.mxu0 0.0
        %893 = vmatmul.mubr.f32.gmra.mrb[0].mxu0 %v732
        %v894 = vpop.f32.mrb[0].mxu0
        %v895 = vadd.f32 0.0, %v894
        %v896 = vpop.f32.mrb[0].mxu0
        %897 = vmatprep.mubr.f32.mxu0 0.0
        %898 = vmatmul.mubr.f32.gmra.mrb[0].mxu0 %v733
        %v899 = vpop.f32.mrb[0].mxu0
        %v900 = vadd.f32 0.0, %v899
        %v901 = vpop.f32.mrb[0].mxu0
        %902 = vmatprep.mubr.f32.mxu0 0.0
        %903 = vmatmul.mubr.f32.gmra.mrb[0].mxu0 %v734
        %v904 = vpop.f32.mrb[0].mxu0
        %v905 = vadd.f32 0.0, %v904
        %v906 = vpop.f32.mrb[0].mxu0
        %907 = vmatprep.mubr.f32.mxu0 0.0
        %908 = vmatmul.mubr.f32.gmra.mrb[0].mxu0 %v735
        %v909 = vpop.f32.mrb[0].mxu0
        %v910 = vadd.f32 0.0, %v909
        %v911 = vpop.f32.mrb[0].mxu0
        %912 = vmatprep.mubr.f32.mxu0 0.0
        %913 = vmatmul.mubr.f32.gmra.mrb[0].mxu0 %v736
        %v914 = vpop.f32.mrb[0].mxu0
        %v915 = vadd.f32 0.0, %v914
        %v916 = vpop.f32.mrb[0].mxu0
        %917 = vmatprep.mubr.f32.mxu0 0.0
        %918 = vmatmul.mubr.f32.gmra.mrb[0].mxu0 %v737
        %v919 = vpop.f32.mrb[0].mxu0
        %v920 = vadd.f32 0.0, %v919
        %v921 = vpop.f32.mrb[0].mxu0
        %922 = vmatprep.mubr.f32.mxu0 0.0
        %923 = vmatmul.mubr.f32.gmra.mrb[0].mxu0 %v738
        %v924 = vpop.f32.mrb[0].mxu0
        %v925 = vadd.f32 0.0, %v924
        %v926 = vpop.f32.mrb[0].mxu0
        %927 = vmatprep.mubr.f32.mxu0 0.0
        %928 = vmatmul.mubr.f32.gmra.mrb[0].mxu0 %v739
        %v929 = vpop.f32.mrb[0].mxu0
        %v930 = vadd.f32 0.0, %v929
        %v931 = vpop.f32.mrb[0].mxu0
        %932 = vmatprep.mubr.f32.mxu0 0.0
        %933 = vmatmul.mubr.f32.gmra.mrb[0].mxu0 %v740
        %v934 = vpop.f32.mrb[0].mxu0
        %v935 = vadd.f32 0.0, %v934
        %v936 = vpop.f32.mrb[0].mxu0
        %937 = vmatprep.mubr.f32.mxu0 0.0
        %938 = vmatmul.mubr.f32.gmra.mrb[0].mxu0 %v741
        %v939 = vpop.f32.mrb[0].mxu0
        %v940 = vadd.f32 0.0, %v939
        %v941 = vpop.f32.mrb[0].mxu0
        %942 = vmatprep.mubr.f32.mxu0 0.0
        %943 = vmatmul.mubr.f32.gmra.mrb[0].mxu0 %v742
        %v944 = vpop.f32.mrb[0].mxu0
        %v945 = vadd.f32 0.0, %v944
        %v946 = vpop.f32.mrb[0].mxu0
        %947 = vmatprep.mubr.f32.mxu0 0.0
        %948 = vmatmul.mubr.f32.gmra.mrb[0].mxu0 %v743
        %v949 = vpop.f32.mrb[0].mxu0
        %v950 = vadd.f32 0.0, %v949
        %v951 = vpop.f32.mrb[0].mxu0
        %952 = vmatprep.mubr.f32.mxu0 0.0
        %953 = vmatmul.mubr.f32.gmra.mrb[0].mxu0 %v744
        %v954 = vpop.f32.mrb[0].mxu0
        %v955 = vadd.f32 0.0, %v954
        %v956 = vpop.f32.mrb[0].mxu0
        %957 = vmatprep.mubr.f32.mxu0 0.0
        %958 = vmatmul.mubr.f32.gmra.mrb[0].mxu0 %v745
        %v959 = vpop.f32.mrb[0].mxu0
        %v960 = vadd.f32 0.0, %v959
        %v961 = vpop.f32.mrb[0].mxu0
        %962 = vmatprep.mubr.f32.mxu0 0.0
        %963 = vmatmul.mubr.f32.gmra.mrb[0].mxu0 %v746
        %v964 = vpop.f32.mrb[0].mxu0
        %v965 = vadd.f32 0.0, %v964
        %v966 = vpop.f32.mrb[0].mxu0
        %967 = vmatprep.mubr.f32.mxu0 0.0
        %968 = vmatmul.mubr.f32.gmra.mrb[0].mxu0 %v747
        %v969 = vpop.f32.mrb[0].mxu0
        %v970 = vadd.f32 0.0, %v969
        %v971 = vpop.f32.mrb[0].mxu0
        %972 = vmatprep.mubr.f32.mxu0 0.0
        %973 = vmatmul.mubr.f32.gmra.mrb[0].mxu0 %v748
        %v974 = vpop.f32.mrb[0].mxu0
        %v975 = vadd.f32 0.0, %v974
        %v976 = vpop.f32.mrb[0].mxu0
        %977 = vmatprep.mubr.f32.mxu0 0.0
        %978 = vmatmul.mubr.f32.gmra.mrb[0].mxu0 %v749
        %v979 = vpop.f32.mrb[0].mxu0
        %v980 = vadd.f32 0.0, %v979
        %v981 = vpop.f32.mrb[0].mxu0
        %982 = vmatprep.mubr.f32.mxu0 0.0
        %983 = vmatmul.mubr.f32.gmra.mrb[0].mxu0 %v750
        %v984 = vpop.f32.mrb[0].mxu0
        %v985 = vadd.f32 0.0, %v984
        %v986 = vpop.f32.mrb[0].mxu0
        %987 = vmatprep.mubr.f32.mxu0 0.0
        %988 = vmatmul.mubr.f32.gmra.mrb[0].mxu0 %v751
        %v989 = vpop.f32.mrb[0].mxu0
        %v990 = vadd.f32 0.0, %v989
        %v991 = vpop.f32.mrb[0].mxu0
        %992 = vmatprep.mubr.f32.mxu0 0.0
        %993 = vmatmul.mubr.f32.gmra.mrb[0].mxu0 %v752
        %v994 = vpop.f32.mrb[0].mxu0
        %v995 = vadd.f32 0.0, %v994
        %v996 = vpop.f32.mrb[0].mxu0
        %997 = vmatprep.mubr.f32.mxu0 0.0
        %998 = vmatmul.mubr.f32.gmra.mrb[0].mxu0 %v753
        %v999 = vpop.f32.mrb[0].mxu0
        %v1000 = vadd.f32 0.0, %v999
        %v1001 = vpop.f32.mrb[0].mxu0
        %1002 = vmatprep.mubr.f32.mxu0 0.0
        %1003 = vmatmul.mubr.f32.gmra.mrb[0].mxu0 %v754
        %v1004 = vpop.f32.mrb[0].mxu0
        %v1005 = vadd.f32 0.0, %v1004
        %v1006 = vpop.f32.mrb[0].mxu0
        %1007 = vmatprep.mubr.f32.mxu0 0.0
        %1008 = vmatmul.mubr.f32.gmra.mrb[0].mxu0 %v755
        %v1009 = vpop.f32.mrb[0].mxu0
        %v1010 = vadd.f32 0.0, %v1009
        %v1011 = vpop.f32.mrb[0].mxu0
        %1012 = vmatprep.mubr.f32.mxu0 0.0
        %1013 = vmatmul.mubr.f32.gmra.mrb[0].mxu0 %v756
        %v1014 = vpop.f32.mrb[0].mxu0
        %v1015 = vadd.f32 0.0, %v1014
        %v1016 = vpop.f32.mrb[0].mxu0
        %1017 = vmatprep.mubr.f32.mxu0 0.0
        %1018 = vmatmul.mubr.f32.gmra.mrb[0].mxu0 %v757
        %v1019 = vpop.f32.mrb[0].mxu0
        %v1020 = vadd.f32 0.0, %v1019
        %v1021 = vpop.f32.mrb[0].mxu0
        %1022 = vmatprep.mubr.f32.mxu0 0.0
        %1023 = vmatmul.mubr.f32.gmra.mrb[0].mxu0 %v758
        %v1024 = vpop.f32.mrb[0].mxu0
        %v1025 = vadd.f32 0.0, %v1024
        %v1026 = vpop.f32.mrb[0].mxu0
        %1027 = vmatprep.mubr.f32.mxu0 0.0
        %1028 = vmatmul.mubr.f32.gmra.mrb[0].mxu0 %v759
        %v1029 = vpop.f32.mrb[0].mxu0
        %v1030 = vadd.f32 0.0, %v1029
        %v1031 = vpop.f32.mrb[0].mxu0
        %1032 = vdwg.mxu0
        %v1033 = vpack.c.bf16 %v880, %v875
        %v1034 = vpack.c.bf16 %v890, %v885
        %v1035 = vpack.c.bf16 %v900, %v895
        %v1036 = vpack.c.bf16 %v910, %v905
        %v1037 = vpack.c.bf16 %v920, %v915
        %v1038 = vpack.c.bf16 %v930, %v925
        %v1039 = vpack.c.bf16 %v940, %v935
        %v1040 = vpack.c.bf16 %v950, %v945
        %v1041 = vpack.c.bf16 %v960, %v955
        %v1042 = vpack.c.bf16 %v970, %v965
        %v1043 = vpack.c.bf16 %v980, %v975
        %v1044 = vpack.c.bf16 %v990, %v985
        %v1045 = vpack.c.bf16 %v1000, %v995
        %v1046 = vpack.c.bf16 %v1010, %v1005
        %v1047 = vpack.c.bf16 %v1020, %v1015
        %v1048 = vpack.c.bf16 %v1030, %v1025
        %v1065 = vunpack.c.l.b16 %v1033
        %v1066 = vunpack.c.h.b16 %v1033
        %v1067 = vunpack.c.l.b16 %v1034
        %v1068 = vunpack.c.h.b16 %v1034
        %v1069 = vunpack.c.l.b16 %v1035
        %v1070 = vunpack.c.h.b16 %v1035
        %v1071 = vunpack.c.l.b16 %v1036
        %v1072 = vunpack.c.h.b16 %v1036
        %v1073 = vunpack.c.l.b16 %v1037
        %v1074 = vunpack.c.h.b16 %v1037
        %v1075 = vunpack.c.l.b16 %v1038
        %v1076 = vunpack.c.h.b16 %v1038
        %v1077 = vunpack.c.l.b16 %v1039
        %v1078 = vunpack.c.h.b16 %v1039
        %v1079 = vunpack.c.l.b16 %v1040
        %v1080 = vunpack.c.h.b16 %v1040
        %v1081 = vunpack.c.l.b16 %v1041
        %v1082 = vunpack.c.h.b16 %v1041
        %v1083 = vunpack.c.l.b16 %v1042
        %v1084 = vunpack.c.h.b16 %v1042
        %v1085 = vunpack.c.l.b16 %v1043
        %v1086 = vunpack.c.h.b16 %v1043
        %v1087 = vunpack.c.l.b16 %v1044
        %v1088 = vunpack.c.h.b16 %v1044
        %v1089 = vunpack.c.l.b16 %v1045
        %v1090 = vunpack.c.h.b16 %v1045
        %v1091 = vunpack.c.l.b16 %v1046
        %v1092 = vunpack.c.h.b16 %v1046
        %v1093 = vunpack.c.l.b16 %v1047
        %v1094 = vunpack.c.h.b16 %v1047
        %v1095 = vunpack.c.l.b16 %v1048
        %v1096 = vunpack.c.h.b16 %v1048
        %v1097 = vpack.c.b16 %v1065, %v1065
        %v1098 = vpack.c.b16 %v1066, %v1066
        %v1099 = vpack.c.b16 %v1067, %v1067
        %v1100 = vpack.c.b16 %v1068, %v1068
        %v1101 = vpack.c.b16 %v1069, %v1069
        %v1102 = vpack.c.b16 %v1070, %v1070
        %v1103 = vpack.c.b16 %v1071, %v1071
        %v1104 = vpack.c.b16 %v1072, %v1072
        %v1105 = vpack.c.b16 %v1073, %v1073
        %v1106 = vpack.c.b16 %v1074, %v1074
        %v1107 = vpack.c.b16 %v1075, %v1075
        %v1108 = vpack.c.b16 %v1076, %v1076
        %v1109 = vpack.c.b16 %v1077, %v1077
        %v1110 = vpack.c.b16 %v1078, %v1078
        %v1111 = vpack.c.b16 %v1079, %v1079
        %v1112 = vpack.c.b16 %v1080, %v1080
        %v1113 = vpack.c.b16 %v1081, %v1081
        %v1114 = vpack.c.b16 %v1082, %v1082
        %v1115 = vpack.c.b16 %v1083, %v1083
        %v1116 = vpack.c.b16 %v1084, %v1084
        %v1117 = vpack.c.b16 %v1085, %v1085
        %v1118 = vpack.c.b16 %v1086, %v1086
        %v1119 = vpack.c.b16 %v1087, %v1087
        %v1120 = vpack.c.b16 %v1088, %v1088
        %v1121 = vpack.c.b16 %v1089, %v1089
        %v1122 = vpack.c.b16 %v1090, %v1090
        %v1123 = vpack.c.b16 %v1091, %v1091
        %v1124 = vpack.c.b16 %v1092, %v1092
        %v1125 = vpack.c.b16 %v1093, %v1093
        %v1126 = vpack.c.b16 %v1094, %v1094
        %v1127 = vpack.c.b16 %v1095, %v1095
        %v1128 = vpack.c.b16 %v1096, %v1096
        %1161 = vst [vmem:[%s287] sm:$0xf] %v1097
        %1162 = vst [vmem:[%s287 + $0x4] sm:$0xf] %v1098
        %1163 = vst [vmem:[%s287 + $0x8] sm:$0xf] %v1099
        %1164 = vst [vmem:[%s287 + $0xc] sm:$0xf] %v1100
        %1165 = vst [vmem:[%s287 + $0x10] sm:$0xf] %v1101
        %1166 = vst [vmem:[%s287 + $0x14] sm:$0xf] %v1102
        %1167 = vst [vmem:[%s287 + $0x18] sm:$0xf] %v1103
        %1168 = vst [vmem:[%s287 + $0x1c] sm:$0xf] %v1104
        %1169 = vst [vmem:[%s287 + $0x20] sm:$0xf] %v1105
        %1170 = vst [vmem:[%s287 + $0x24] sm:$0xf] %v1106
        %1171 = vst [vmem:[%s287 + $0x28] sm:$0xf] %v1107
        %1172 = vst [vmem:[%s287 + $0x2c] sm:$0xf] %v1108
        %1173 = vst [vmem:[%s287 + $0x30] sm:$0xf] %v1109
        %1174 = vst [vmem:[%s287 + $0x34] sm:$0xf] %v1110
        %1175 = vst [vmem:[%s287 + $0x38] sm:$0xf] %v1111
        %1176 = vst [vmem:[%s287 + $0x3c] sm:$0xf] %v1112
        %1177 = vst [vmem:[%s287 + $0x40] sm:$0xf] %v1113
        %1178 = vst [vmem:[%s287 + $0x44] sm:$0xf] %v1114
        %1179 = vst [vmem:[%s287 + $0x48] sm:$0xf] %v1115
        %1180 = vst [vmem:[%s287 + $0x4c] sm:$0xf] %v1116
        %1181 = vst [vmem:[%s287 + $0x50] sm:$0xf] %v1117
        %1182 = vst [vmem:[%s287 + $0x54] sm:$0xf] %v1118
        %1183 = vst [vmem:[%s287 + $0x58] sm:$0xf] %v1119
        %1184 = vst [vmem:[%s287 + $0x5c] sm:$0xf] %v1120
        %1185 = vst [vmem:[%s287 + $0x60] sm:$0xf] %v1121
        %1186 = vst [vmem:[%s287 + $0x64] sm:$0xf] %v1122
        %1187 = vst [vmem:[%s287 + $0x68] sm:$0xf] %v1123
        %1188 = vst [vmem:[%s287 + $0x6c] sm:$0xf] %v1124
        %1189 = vst [vmem:[%s287 + $0x70] sm:$0xf] %v1125
        %1190 = vst [vmem:[%s287 + $0x74] sm:$0xf] %v1126
        %1191 = vst [vmem:[%s287 + $0x78] sm:$0xf] %v1127
        %1192 = vst [vmem:[%s287 + $0x7c] sm:$0xf] %v1128
        %s1193 = sand.u32 %s148, 1
        %s1194 = scalar_lea.sflag [#allocation4], %s1193
        %s1195 = sand.u32 %s148, 1
        %s1196 = smul.addr %s1195, 256
        %s1197 = scalar_lea.vmem [#allocation5], %s1196
        %s1198 = sand.u32 %s174, 1
        %s1199 = scalar_lea.sflag [#allocation7], %s1198
        %s1200 = sand.u32 %s174, 1
        %s1201 = smul.addr %s1200, 128
        %s1202 = scalar_lea.vmem [#allocation6], %s1201
        // Predicated region
        $region45: #{tpu_custom_call.1} parent=39 // pred_check
          %p1203 = pneg %p158
        $region46: #{tpu_custom_call.1} parent=39 // pred_check_branch
          %1205 = sbr.rel (%p1203) target = $region48
        $region47: #{tpu_custom_call.1} parent=39 // pred_region
          %s1206 = smul.u32 32, %s25
          %s1208 = ssub.s32 4096, 4096
          %1209 = vsyncadd %s1194, %s1208
          %s1210 = smul.addr %s1206, 128
          %s1211 = scalar_lea.hbm %s5, %s1210
          %s1212 = sshll.u32 %s1197, 4
          %s1213 = int_to_ptr.vmem [resolvable:$true] %s1212
          %1218 = dma.vmem_to_hbm [thread:$0]  %s1213, 4096, %s1211, %s1194, 128, 128, 8
        $region48: #{tpu_custom_call.1} parent=39 // pred_fallthru
          _
        // Predicated region
        $region49: #{tpu_custom_call.1} parent=39 // pred_check
          %p1219 = pneg %p184
        $region50: #{tpu_custom_call.1} parent=39 // pred_check_branch
          %1221 = sbr.rel (%p1219) target = $region52
        $region51: #{tpu_custom_call.1} parent=39 // pred_region
          %s1222 = smul.u32 32, %s25
          %s1224 = ssub.s32 2048, 2048
          %1225 = vsyncadd %s1199, %s1224
          %s1226 = smul.addr %s1222, 64
          %s1227 = scalar_lea.hbm %s6, %s1226
          %s1228 = sshll.u32 %s1202, 4
          %s1229 = int_to_ptr.vmem [resolvable:$true] %s1228
          %1234 = dma.vmem_to_hbm [thread:$0]  %s1229, 2048, %s1227, %s1199, 64, 64, 4
        $region52: #{tpu_custom_call.1} parent=39 // pred_fallthru
          _
      $region40: #{tpu_custom_call.1} parent=5 // pred_fallthru
        _
      %p1235 = scmp.le.s32.totalorder 2, %s20
      // Predicated region
      $region53: #{tpu_custom_call.1} parent=5 // pred_check
        %p1236 = pneg %p1235
      $region54: #{tpu_custom_call.1} parent=5 // pred_check_branch
        %1238 = sbr.rel (%p1236) target = $region56
      $region55: #{tpu_custom_call.1} parent=5 // pred_region
        %s1239 = ssub.s32 %s20, 2
        // Predicated region
        $region57: #{tpu_custom_call.1} parent=55 // pred_check
          %p1240 = pneg %p164
        $region58: #{tpu_custom_call.1} parent=55 // pred_check_branch
          %1242 = sbr.rel (%p1240) target = $region60
        $region59: #{tpu_custom_call.1} parent=55 // pred_region
          %s1243 = sand.u32 %s149, 1
          %s1244 = scalar_lea.sflag [#allocation4], %s1243
          %s1245 = sand.u32 %s149, 1
          %s1246 = smul.addr %s1245, 256
          %s1247 = scalar_lea.vmem [#allocation5], %s1246
          %1248 = dma.done %s1244, 4096
        $region60: #{tpu_custom_call.1} parent=55 // pred_fallthru
          _
        // Predicated region
        $region61: #{tpu_custom_call.1} parent=55 // pred_check
          %p1249 = pneg %p190
        $region62: #{tpu_custom_call.1} parent=55 // pred_check_branch
          %1251 = sbr.rel (%p1249) target = $region64
        $region63: #{tpu_custom_call.1} parent=55 // pred_region
          %s1252 = sand.u32 %s175, 1
          %s1253 = scalar_lea.sflag [#allocation7], %s1252
          %s1254 = sand.u32 %s175, 1
          %s1255 = smul.addr %s1254, 128
          %s1256 = scalar_lea.vmem [#allocation6], %s1255
          %1257 = dma.done %s1253, 2048
        $region64: #{tpu_custom_call.1} parent=55 // pred_fallthru
          _
      $region56: #{tpu_custom_call.1} parent=5 // pred_fallthru
        _
    $region6: #{tpu_custom_call.1} parent=1 // loop_footer
      %s24 = sadd.s32 1, %s20
    $region7: #{tpu_custom_call.1} parent=1 // loop_footer_branch
      %19 = sbr.rel target = $region3
    $region8: #{tpu_custom_call.1} parent=1 // loop_exit
      _
    %1258 = vsyncpa [#allocation3], 1
    %s1259 = scalar_lea.sflag [#allocation3], 1
    %1260 = vsyncpa %s1259, 1
    %1261 = vsyncpa [#allocation4], 1
    %s1262 = scalar_lea.sflag [#allocation4], 1
    %1263 = vsyncpa %s1262, 1
    %1264 = vsyncpa [#allocation7], 1
    %s1265 = scalar_lea.sflag [#allocation7], 1
    %1266 = vsyncpa %s1265, 1

</llo_original>
